<compile_context>
chip_gen: v7x
topology: tpu7x:2x2x1
jax: 0.10.0
libtpu: 0.0.40
codegen_flags: <defaults>
</compile_context>

<pallas_src>
import jax
import jax.numpy as jnp
from jax.experimental import pallas as pl
from jax.experimental.pallas import tpu as pltpu

# ---------------------------------------------------------------------------
# Configuration (mirrors the `params` namespace used by BimodalCNN.__init__)
# ---------------------------------------------------------------------------
TEXT_DIM = 16
AUDIO_DIM = 8
SPKR_EMB_DIM = 4
NUM_EMBEDDINGS = 50
NUM_SPEAKERS = 6
PADDING_IDX = 0
OUTPUT_DIM = 3            # > 1 -> softmax head
OUT_PAD = 128             # lane-dense padded output width (sliced back to OUTPUT_DIM)
HIDDEN_DIM = 32
OUT_CHANNELS = 32
KERNEL_SIZE = 3
DROPOUT = 0.0             # p=0 -> F.dropout == identity
IN_CHANNELS = TEXT_DIM + AUDIO_DIM + SPKR_EMB_DIM   # 28

BATCH = 2
SEQ = 16

L1 = SEQ - KERNEL_SIZE + 1               # conv1 (stride 1, VALID) output length = 14
L2 = (L1 - KERNEL_SIZE) // 2 + 1         # conv2 (stride 2, VALID) output length = 6
L2_FULL = L1 - KERNEL_SIZE + 1           # conv2 at stride 1 = 12; even offsets == stride-2 rows
ROWS1 = BATCH * L1                       # conv1 im2col rows (batch stacked on sublanes) = 28
ROWS2 = ROWS1 - (KERNEL_SIZE - 1)        # conv2 windows over stacked h1 = 26 (2 straddle rows masked)
KC1 = KERNEL_SIZE * IN_CHANNELS          # 84
KC1_PAD = 128                            # conv1 contraction dim padded to full lane width
KC2 = KERNEL_SIZE * OUT_CHANNELS         # 96
LEAK = 0.01                              # F.leaky_relu default negative slope

# Packed-parameter slab layout (row offsets; every section 16-row aligned for bf16 tiles)
R_W1 = 0                                 # rows [0,128): w1 im2col'd, padded to 128 rows
R_W2 = R_W1 + KC1_PAD                    # 128: w2 im2col'd (96 rows)
R_FC1W = R_W2 + KC2                      # 224: fc1 weight (32 rows)
R_FC2W = R_FC1W + OUT_CHANNELS           # 256: fc2 weight padded to 128 lanes (32 rows)
R_B1 = R_FC2W + HIDDEN_DIM               # 288: conv1 bias (1 row)
R_B2 = R_B1 + 16                         # 304: conv2 bias
R_FC1B = R_B2 + 16                       # 320: fc1 bias
R_FC2B = R_FC1B + 16                     # 336: fc2 bias (padded lanes = -1e30)
SLAB_ROWS = R_FC2B + 16                  # 352


# ---------------------------------------------------------------------------
# Pallas kernel: single un-gridded invocation, 4 MXU matmuls total.
# ---------------------------------------------------------------------------
def bimodal_kernel(xcol_ref, w_ref, out_ref):
    # ---- conv1 + leaky_relu: ONE im2col matmul (ROWS1, KC1_PAD) @ (KC1_PAD, C_out) ----
    w1 = w_ref[R_W1:R_W1 + KC1_PAD, 0:OUT_CHANNELS]                       # (128, 32) bf16
    b1 = w_ref[R_B1:R_B1 + 1, 0:OUT_CHANNELS].astype(jnp.float32)         # (1, 32)
    acc1 = jnp.dot(xcol_ref[...], w1, preferred_element_type=jnp.float32) + b1
    h1 = jnp.where(acc1 > 0, acc1, LEAK * acc1)                           # (ROWS1, 32) f32

    # ---- conv2 + leaky_relu: in-kernel im2col over the batch-stacked h1, ONE matmul.
    #      Rows whose window straddles the sample boundary are computed but masked out
    #      of the max-pool below. ----
    h1_col = jnp.concatenate(
        [h1[k:k + ROWS2, :].astype(jnp.bfloat16) for k in range(KERNEL_SIZE)],
        axis=1)                                                            # (ROWS2, 96)
    w2 = w_ref[R_W2:R_W2 + KC2, 0:OUT_CHANNELS]                            # (96, 32) bf16
    b2 = w_ref[R_B2:R_B2 + 1, 0:OUT_CHANNELS].astype(jnp.float32)
    acc2 = jnp.dot(h1_col, w2, preferred_element_type=jnp.float32) + b2
    h2 = jnp.where(acc2 > 0, acc2, LEAK * acc2)                            # (ROWS2, 32) f32

    # ---- global max-pool over the stride-2 positions of each sample (masked reduces;
    #      everything stays in vregs, no VMEM scratch round trip). ----
    row = jax.lax.broadcasted_iota(jnp.int32, (ROWS2, OUT_CHANNELS), 0)
    pooled_rows = []
    for b in range(BATCH):
        off = row - b * L1                         # window start within sample b
        sel = (off >= 0) & (off < L2_FULL) & ((off & 1) == 0)
        pooled_rows.append(
            jnp.max(jnp.where(sel, h2, -jnp.inf), axis=0, keepdims=True))  # (1, 32)
    pooled = jnp.concatenate(pooled_rows, axis=0)                          # (B, 32) f32

    # ---- batched fc1 -> tanh -> fc2 -> softmax (dropout p=0 is identity) ----
    fc1w = w_ref[R_FC1W:R_FC1W + OUT_CHANNELS, 0:HIDDEN_DIM]               # (32, 32) bf16
    fc1b = w_ref[R_FC1B:R_FC1B + 1, 0:HIDDEN_DIM].astype(jnp.float32)
    f1 = jnp.tanh(jnp.dot(pooled.astype(jnp.bfloat16), fc1w,
                          preferred_element_type=jnp.float32) + fc1b)      # (B, H) f32

    fc2w = w_ref[R_FC2W:R_FC2W + HIDDEN_DIM, :]                            # (32, 128) bf16
    fc2b = w_ref[R_FC2B:R_FC2B + 1, :].astype(jnp.float32)
    logits = jnp.dot(f1.astype(jnp.bfloat16), fc2w,
                     preferred_element_type=jnp.float32) + fc2b            # (B, OUT_PAD)
    m = jnp.max(logits, axis=-1, keepdims=True)
    e = jnp.exp(logits - m)                     # padded lanes had bias -1e30 -> exp == 0
    out_ref[...] = e * pl.reciprocal(jnp.sum(e, axis=-1, keepdims=True), approx=True)


# ---------------------------------------------------------------------------
# Wrapper: im2col + parameter packing in XLA, single pallas_call, slice output.
# ---------------------------------------------------------------------------
def _pack_params(w1, b1, w2, b2, fc1w, fc1b, fc2w, fc2b):
    """One contiguous bf16 slab holding every weight/bias (single input DMA)."""
    slab = jnp.zeros((SLAB_ROWS, OUT_PAD), jnp.float32)
    slab = slab.at[R_W1:R_W1 + KC1, :OUT_CHANNELS].set(w1.reshape(KC1, OUT_CHANNELS))
    slab = slab.at[R_W2:R_W2 + KC2, :OUT_CHANNELS].set(w2.reshape(KC2, OUT_CHANNELS))
    slab = slab.at[R_FC1W:R_FC1W + OUT_CHANNELS, :HIDDEN_DIM].set(fc1w)
    slab = slab.at[R_FC2W:R_FC2W + HIDDEN_DIM, :OUTPUT_DIM].set(fc2w)
    slab = slab.at[R_B1, :OUT_CHANNELS].set(b1[0])
    slab = slab.at[R_B2, :OUT_CHANNELS].set(b2[0])
    slab = slab.at[R_FC1B, :HIDDEN_DIM].set(fc1b[0])
    slab = slab.at[R_FC2B, :].set(-1e30)            # padded-lane bias -> exact softmax
    slab = slab.at[R_FC2B, :OUTPUT_DIM].set(fc2b[0])
    return slab.astype(jnp.bfloat16)


def _im2col_conv1(x):
    """x: (B, S, C_in) -> (B*L1, KC1_PAD) bf16; conv1 becomes a single matmul."""
    idx = jnp.arange(L1)[:, None] + jnp.arange(KERNEL_SIZE)[None, :]   # (L1, K)
    xw = x[:, idx, :]                                                  # (B, L1, K, C_in)
    x_col = xw.reshape(ROWS1, KC1)
    x_col = jnp.pad(x_col, ((0, 0), (0, KC1_PAD - KC1)))               # lane-pad to 128
    return x_col.astype(jnp.bfloat16)


@jax.jit
def bimodal_cnn_forward(x, w1, b1, w2, b2, fc1w, fc1b, fc2w, fc2b):
    """x: (B, S, C_in) f32 concatenated [acoustic | text_emb | speaker_emb]."""
    x_col = _im2col_conv1(x)
    slab = _pack_params(w1, b1, w2, b2, fc1w, fc1b, fc2w, fc2b)

    cost = pl.CostEstimate(
        flops=2 * (ROWS1 * KC1_PAD * OUT_CHANNELS
                   + ROWS2 * KC2 * OUT_CHANNELS
                   + BATCH * OUT_CHANNELS * HIDDEN_DIM
                   + BATCH * HIDDEN_DIM * OUT_PAD),
        transcendentals=BATCH * (HIDDEN_DIM + OUT_PAD + 1),
        bytes_accessed=x_col.size * 2 + slab.size * 2 + BATCH * OUT_PAD * 4)

    out = pl.pallas_call(
        bimodal_kernel,
        out_shape=jax.ShapeDtypeStruct((BATCH, OUT_PAD), jnp.float32),
        cost_estimate=cost,
        compiler_params=pltpu.CompilerParams(vmem_limit_bytes=8 * 1024 * 1024),
    )(x_col, slab)
    return out[:, :OUTPUT_DIM]                                          # (B, O)


# ---------------------------------------------------------------------------
# Pure-JAX reference (independent code path: lax.conv_general_dilated, f32)
# ---------------------------------------------------------------------------
def reference_forward(x, w1, b1, w2, b2, fc1w, fc1b, fc2w, fc2b):
    xc = jnp.transpose(x, (0, 2, 1))                                      # NCW
    w1_oik = jnp.transpose(w1, (2, 1, 0))                                 # (O, I, K)
    c1 = jax.lax.conv_general_dilated(xc, w1_oik, (1,), "VALID",
                                      dimension_numbers=("NCH", "OIH", "NCH"))
    c1 = c1 + b1[0][None, :, None]
    c1 = jnp.where(c1 > 0, c1, LEAK * c1)
    w2_oik = jnp.transpose(w2, (2, 1, 0))
    c2 = jax.lax.conv_general_dilated(c1, w2_oik, (2,), "VALID",
                                      dimension_numbers=("NCH", "OIH", "NCH"))
    c2 = c2 + b2[0][None, :, None]
    c2 = jnp.where(c2 > 0, c2, LEAK * c2)
    pooled = jnp.max(c2, axis=2)
    f1 = jnp.tanh(pooled @ fc1w + fc1b)
    logits = f1 @ fc2w + fc2b
    return jax.nn.softmax(logits, axis=1)


# ---------------------------------------------------------------------------
# Glue: embedding lookups with max_norm renormalization (PyTorch semantics)
# ---------------------------------------------------------------------------
def embedding_lookup(table, idx, max_norm=1.0):
    rows = table[idx]
    norms = jnp.linalg.norm(rows, axis=-1, keepdims=True)
    scale = jnp.where(norms > max_norm, max_norm / (norms + 1e-7), 1.0)
    return rows * scale


if __name__ == "__main__":
    key = jax.random.PRNGKey(0)
    ks = jax.random.split(key, 12)

    # Parameters (deterministic synthetic init)
    emb_table = 0.5 * jax.random.normal(ks[0], (NUM_EMBEDDINGS, TEXT_DIM), jnp.float32)
    emb_table = emb_table.at[PADDING_IDX].set(0.0)                        # padding_idx row
    spk_table = 0.5 * jax.random.normal(ks[1], (NUM_SPEAKERS, SPKR_EMB_DIM), jnp.float32)

    w1 = 0.1 * jax.random.normal(ks[2], (KERNEL_SIZE, IN_CHANNELS, OUT_CHANNELS), jnp.float32)
    b1 = 0.1 * jax.random.normal(ks[3], (1, OUT_CHANNELS), jnp.float32)
    w2 = 0.1 * jax.random.normal(ks[4], (KERNEL_SIZE, OUT_CHANNELS, OUT_CHANNELS), jnp.float32)
    b2 = 0.1 * jax.random.normal(ks[5], (1, OUT_CHANNELS), jnp.float32)
    fc1w = 0.1 * jax.random.normal(ks[6], (OUT_CHANNELS, HIDDEN_DIM), jnp.float32)
    fc1b = 0.1 * jax.random.normal(ks[7], (1, HIDDEN_DIM), jnp.float32)
    fc2w = 0.1 * jax.random.normal(ks[8], (HIDDEN_DIM, OUTPUT_DIM), jnp.float32)
    fc2b = 0.1 * jax.random.normal(ks[9], (1, OUTPUT_DIM), jnp.float32)

    # Inputs
    acoustic_input = jax.random.normal(ks[10], (BATCH, SEQ, AUDIO_DIM), jnp.float32)
    text_input = jax.random.randint(ks[11], (BATCH, SEQ), 0, NUM_EMBEDDINGS, jnp.int32)
    speaker_input = jax.random.randint(jax.random.PRNGKey(123), (BATCH, SEQ), 0,
                                       NUM_SPEAKERS, jnp.int32)

    # Glue: embeddings + concat (cat along feature dim; kernel is channels-last)
    embs = embedding_lookup(emb_table, text_input, max_norm=1.0)
    spk_embs = embedding_lookup(spk_table, speaker_input, max_norm=1.0)
    x = jnp.concatenate([acoustic_input, embs, spk_embs], axis=2)         # (B, S, C_in)

    out = bimodal_cnn_forward(x, w1, b1, w2, b2, fc1w, fc1b, fc2w, fc2b)
    out = jax.block_until_ready(out)

    ref = reference_forward(x, w1, b1, w2, b2, fc1w, fc1b, fc2w, fc2b)
    assert out.shape == (BATCH, OUTPUT_DIM)
    # bf16 matmul inputs (f32 accumulation) -> compare with a bf16-appropriate tolerance.
    assert jnp.allclose(out, ref, atol=2e-2, rtol=2e-2), (out, ref)
    # TODO(synk): the module's dropout > 0 training-mode randomness has no deterministic
    # equivalent here; dropout=0.0 is used so F.dropout is the identity.
    print("KERNEL_OK")
</pallas_src>

<mosaic_0001>
module attributes {stable_mosaic.version = 11 : i64} {
  func.func @bimodal_kernel(%arg0: memref<28x128xbf16, #tpu.memory_space<vmem>>, %arg1: memref<352x128xbf16, #tpu.memory_space<vmem>>, %arg2: memref<2x128xf32, #tpu.memory_space<vmem>>) attributes {dimension_semantics = [], scalar_prefetch = 0 : i64, scratch_operands = 0 : i64, tpu.core_type = #tpu.core_type<tc>} {
    %c0 = arith.constant 0 : index
    %c0_0 = arith.constant 0 : index
    %0 = vector.load %arg1[%c0, %c0_0] : memref<352x128xbf16, #tpu.memory_space<vmem>>, vector<128x32xbf16>
    %c288 = arith.constant 288 : index
    %c0_1 = arith.constant 0 : index
    %1 = vector.load %arg1[%c288, %c0_1] : memref<352x128xbf16, #tpu.memory_space<vmem>>, vector<1x32xbf16>
    %2 = arith.extf %1 : vector<1x32xbf16> to vector<1x32xf32>
    %c0_2 = arith.constant 0 : index
    %c0_3 = arith.constant 0 : index
    %3 = vector.load %arg0[%c0_2, %c0_3] : memref<28x128xbf16, #tpu.memory_space<vmem>>, vector<28x128xbf16>
    %cst = arith.constant dense<0.000000e+00> : vector<28x32xf32>
    %4 = tpu.matmul %3, %0, %cst {dimension_numbers = #tpu.dot_dimension_numbers<[1], [0], [0], [1], [0, 0, 1, 1], [], []>} : vector<28x128xbf16>, vector<128x32xbf16>, vector<28x32xf32> -> vector<28x32xf32>
    %5 = vector.broadcast %2 : vector<1x32xf32> to vector<28x32xf32>
    %6 = arith.addf %4, %5 : vector<28x32xf32>
    %cst_4 = arith.constant 0.000000e+00 : f32
    %7 = vector.broadcast %cst_4 : f32 to vector<28x32xf32>
    %8 = arith.cmpf ogt, %6, %7 : vector<28x32xf32>
    %cst_5 = arith.constant 0.00999999977 : f32
    %9 = vector.broadcast %cst_5 : f32 to vector<28x32xf32>
    %10 = arith.mulf %9, %6 : vector<28x32xf32>
    %11 = arith.select %8, %6, %10 : vector<28x32xi1>, vector<28x32xf32>
    %12 = vector.extract_strided_slice %11 {offsets = [0, 0], sizes = [26, 32], strides = [1, 1]} : vector<28x32xf32> to vector<26x32xf32>
    %13 = arith.truncf %12 : vector<26x32xf32> to vector<26x32xbf16>
    %14 = vector.extract_strided_slice %11 {offsets = [1, 0], sizes = [26, 32], strides = [1, 1]} : vector<28x32xf32> to vector<26x32xf32>
    %15 = arith.truncf %14 : vector<26x32xf32> to vector<26x32xbf16>
    %16 = vector.extract_strided_slice %11 {offsets = [2, 0], sizes = [26, 32], strides = [1, 1]} : vector<28x32xf32> to vector<26x32xf32>
    %17 = arith.truncf %16 : vector<26x32xf32> to vector<26x32xbf16>
    %18 = tpu.concatenate %13, %15, %17 in 1 : vector<26x32xbf16>, vector<26x32xbf16>, vector<26x32xbf16> -> vector<26x96xbf16>
    %c128 = arith.constant 128 : index
    %c0_6 = arith.constant 0 : index
    %19 = vector.load %arg1[%c128, %c0_6] : memref<352x128xbf16, #tpu.memory_space<vmem>>, vector<96x32xbf16>
    %c304 = arith.constant 304 : index
    %c0_7 = arith.constant 0 : index
    %20 = vector.load %arg1[%c304, %c0_7] : memref<352x128xbf16, #tpu.memory_space<vmem>>, vector<1x32xbf16>
    %21 = arith.extf %20 : vector<1x32xbf16> to vector<1x32xf32>
    %cst_8 = arith.constant dense<0.000000e+00> : vector<26x32xf32>
    %22 = tpu.matmul %18, %19, %cst_8 {dimension_numbers = #tpu.dot_dimension_numbers<[1], [0], [0], [1], [0, 0, 1, 1], [], []>} : vector<26x96xbf16>, vector<96x32xbf16>, vector<26x32xf32> -> vector<26x32xf32>
    %23 = vector.broadcast %21 : vector<1x32xf32> to vector<26x32xf32>
    %24 = arith.addf %22, %23 : vector<26x32xf32>
    %cst_9 = arith.constant 0.000000e+00 : f32
    %25 = vector.broadcast %cst_9 : f32 to vector<26x32xf32>
    %26 = arith.cmpf ogt, %24, %25 : vector<26x32xf32>
    %cst_10 = arith.constant 0.00999999977 : f32
    %27 = vector.broadcast %cst_10 : f32 to vector<26x32xf32>
    %28 = arith.mulf %27, %24 : vector<26x32xf32>
    %29 = arith.select %26, %24, %28 : vector<26x32xi1>, vector<26x32xf32>
    %30 = tpu.iota {dimensions = array<i32: 0>} : vector<26x32xi32>
    %c0_i32 = arith.constant 0 : i32
    %31 = vector.broadcast %c0_i32 : i32 to vector<26x32xi32>
    %32 = arith.subi %30, %31 : vector<26x32xi32>
    %c0_i32_11 = arith.constant 0 : i32
    %33 = vector.broadcast %c0_i32_11 : i32 to vector<26x32xi32>
    %34 = arith.cmpi sge, %32, %33 : vector<26x32xi32>
    %c12_i32 = arith.constant 12 : i32
    %35 = vector.broadcast %c12_i32 : i32 to vector<26x32xi32>
    %36 = arith.cmpi slt, %32, %35 : vector<26x32xi32>
    %37 = arith.andi %34, %36 : vector<26x32xi1>
    %c1_i32 = arith.constant 1 : i32
    %38 = vector.broadcast %c1_i32 : i32 to vector<26x32xi32>
    %39 = arith.andi %32, %38 : vector<26x32xi32>
    %c0_i32_12 = arith.constant 0 : i32
    %40 = vector.broadcast %c0_i32_12 : i32 to vector<26x32xi32>
    %41 = arith.cmpi eq, %39, %40 : vector<26x32xi32>
    %42 = arith.andi %37, %41 : vector<26x32xi1>
    %cst_13 = arith.constant 0xFF800000 : f32
    %43 = vector.broadcast %cst_13 : f32 to vector<26x32xf32>
    %44 = arith.select %42, %29, %43 : vector<26x32xi1>, vector<26x32xf32>
    %cst_14 = arith.constant dense<0xFF800000> : vector<32xf32>
    %45 = vector.multi_reduction <maximumf>, %44, %cst_14 [0] : vector<26x32xf32> to vector<32xf32>
    %46 = vector.shape_cast %45 : vector<32xf32> to vector<1x32xf32>
    %c14_i32 = arith.constant 14 : i32
    %47 = vector.broadcast %c14_i32 : i32 to vector<26x32xi32>
    %48 = arith.subi %30, %47 : vector<26x32xi32>
    %c0_i32_15 = arith.constant 0 : i32
    %49 = vector.broadcast %c0_i32_15 : i32 to vector<26x32xi32>
    %50 = arith.cmpi sge, %48, %49 : vector<26x32xi32>
    %c12_i32_16 = arith.constant 12 : i32
    %51 = vector.broadcast %c12_i32_16 : i32 to vector<26x32xi32>
    %52 = arith.cmpi slt, %48, %51 : vector<26x32xi32>
    %53 = arith.andi %50, %52 : vector<26x32xi1>
    %c1_i32_17 = arith.constant 1 : i32
    %54 = vector.broadcast %c1_i32_17 : i32 to vector<26x32xi32>
    %55 = arith.andi %48, %54 : vector<26x32xi32>
    %c0_i32_18 = arith.constant 0 : i32
    %56 = vector.broadcast %c0_i32_18 : i32 to vector<26x32xi32>
    %57 = arith.cmpi eq, %55, %56 : vector<26x32xi32>
    %58 = arith.andi %53, %57 : vector<26x32xi1>
    %cst_19 = arith.constant 0xFF800000 : f32
    %59 = vector.broadcast %cst_19 : f32 to vector<26x32xf32>
    %60 = arith.select %58, %29, %59 : vector<26x32xi1>, vector<26x32xf32>
    %cst_20 = arith.constant dense<0xFF800000> : vector<32xf32>
    %61 = vector.multi_reduction <maximumf>, %60, %cst_20 [0] : vector<26x32xf32> to vector<32xf32>
    %62 = vector.shape_cast %61 : vector<32xf32> to vector<1x32xf32>
    %63 = tpu.concatenate %46, %62 in 0 : vector<1x32xf32>, vector<1x32xf32> -> vector<2x32xf32>
    %c224 = arith.constant 224 : index
    %c0_21 = arith.constant 0 : index
    %64 = vector.load %arg1[%c224, %c0_21] : memref<352x128xbf16, #tpu.memory_space<vmem>>, vector<32x32xbf16>
    %c320 = arith.constant 320 : index
    %c0_22 = arith.constant 0 : index
    %65 = vector.load %arg1[%c320, %c0_22] : memref<352x128xbf16, #tpu.memory_space<vmem>>, vector<1x32xbf16>
    %66 = arith.extf %65 : vector<1x32xbf16> to vector<1x32xf32>
    %67 = arith.truncf %63 : vector<2x32xf32> to vector<2x32xbf16>
    %cst_23 = arith.constant dense<0.000000e+00> : vector<2x32xf32>
    %68 = tpu.matmul %67, %64, %cst_23 {dimension_numbers = #tpu.dot_dimension_numbers<[1], [0], [0], [1], [0, 0, 1, 1], [], []>} : vector<2x32xbf16>, vector<32x32xbf16>, vector<2x32xf32> -> vector<2x32xf32>
    %69 = vector.broadcast %66 : vector<1x32xf32> to vector<2x32xf32>
    %70 = arith.addf %68, %69 : vector<2x32xf32>
    %71 = math.tanh %70 : vector<2x32xf32>
    %c256 = arith.constant 256 : index
    %c0_24 = arith.constant 0 : index
    %72 = vector.load %arg1[%c256, %c0_24] : memref<352x128xbf16, #tpu.memory_space<vmem>>, vector<32x128xbf16>
    %c336 = arith.constant 336 : index
    %c0_25 = arith.constant 0 : index
    %73 = vector.load %arg1[%c336, %c0_25] : memref<352x128xbf16, #tpu.memory_space<vmem>>, vector<1x128xbf16>
    %74 = arith.extf %73 : vector<1x128xbf16> to vector<1x128xf32>
    %75 = arith.truncf %71 : vector<2x32xf32> to vector<2x32xbf16>
    %cst_26 = arith.constant dense<0.000000e+00> : vector<2x128xf32>
    %76 = tpu.matmul %75, %72, %cst_26 {dimension_numbers = #tpu.dot_dimension_numbers<[1], [0], [0], [1], [0, 0, 1, 1], [], []>} : vector<2x32xbf16>, vector<32x128xbf16>, vector<2x128xf32> -> vector<2x128xf32>
    %77 = vector.broadcast %74 : vector<1x128xf32> to vector<2x128xf32>
    %78 = arith.addf %76, %77 : vector<2x128xf32>
    %cst_27 = arith.constant dense<0xFF800000> : vector<2xf32>
    %79 = vector.multi_reduction <maximumf>, %78, %cst_27 [1] : vector<2x128xf32> to vector<2xf32>
    %80 = vector.shape_cast %79 : vector<2xf32> to vector<2x1xf32>
    %81 = vector.broadcast %80 : vector<2x1xf32> to vector<2x128xf32>
    %82 = arith.subf %78, %81 : vector<2x128xf32>
    %83 = math.exp %82 : vector<2x128xf32>
    %cst_28 = arith.constant dense<0.000000e+00> : vector<2xf32>
    %84 = vector.multi_reduction <add>, %83, %cst_28 [1] : vector<2x128xf32> to vector<2xf32>
    %85 = vector.shape_cast %84 : vector<2xf32> to vector<2x1xf32>
    %86 = tpu.reciprocal %85 {approx = true} : vector<2x1xf32> -> vector<2x1xf32>
    %87 = vector.broadcast %86 : vector<2x1xf32> to vector<2x128xf32>
    %88 = arith.mulf %83, %87 : vector<2x128xf32>
    %c0_29 = arith.constant 0 : index
    %c0_30 = arith.constant 0 : index
    %89 = vector.load %arg2[%c0_29, %c0_30] : memref<2x128xf32, #tpu.memory_space<vmem>>, vector<2x128xf32>
    tpu.vector_store %arg2[%c0_29, %c0_30], %88 {strides = array<i32>} : memref<2x128xf32, #tpu.memory_space<vmem>>, vector<2x128xf32>,
    return
  }
}

</mosaic_0001>

<llo_original>
// kernel: bimodal_cnn_forward.1
$region0: #{bimodal_cnn_forward.1}
  #allocation0 [shape = 'u32[]', space=smem, size = 0x4, offset = 0x4, fixed_abs, tag = 'smem constant byte address 0x4 - core index']
  #allocation1 [shape = 'u32[144,128]{1,0:T(1,128)}', space=vmem, size = 0x12000, scoped, tag = 'internal scratch']
  %s0 = inlined_call_operand.vmem [shape: bf16[28,128], index: 0, kind: input, shape index: {}]
  %s1 = inlined_call_operand.vmem [shape: bf16[352,128], index: 1, kind: input, shape index: {}]
  %s2 = inlined_call_operand.hbm [shape: f32[2,128], index: 2, kind: output, shape index: {}]
  %s3 = sld [smem:[#allocation0]]
  $region18: #{bimodal_cnn_forward.1} parent=0
    _
  %s5 = ssub.s32 1, %s3
  %s6 = scalar_select 0, %s5, %s3
  $region1: #{bimodal_cnn_forward.1} parent=0
    #allocation2 [shape = 'u8[1024]{0}', space=vmem, size = 0x400, scoped, tag = 'output window, operand 0, single buffered']
    #allocation3 [shape = 's32[1]{0}', space=sflag, size = 0x4, scoped, tag = 'scoped memory for bimodal_cnn_forward.1']
    %7 = vsyncpa [#allocation3], 0
    // Predicated region
    $region2: #{bimodal_cnn_forward.1} parent=1 // pred_check
      _
    $region3: #{bimodal_cnn_forward.1} parent=1 // pred_check_branch
      %9 = sbr.rel (0) target = $region5
    $region4: #{bimodal_cnn_forward.1} parent=1 // pred_region
      _
    $region5: #{bimodal_cnn_forward.1} parent=1 // pred_fallthru
      _
    // Predicated region
    $region6: #{bimodal_cnn_forward.1} parent=1 // pred_check
      _
    $region7: #{bimodal_cnn_forward.1} parent=1 // pred_check_branch
      %11 = sbr.rel (0) target = $region9
    $region8: #{bimodal_cnn_forward.1} parent=1 // pred_region
      _
    $region9: #{bimodal_cnn_forward.1} parent=1 // pred_fallthru
      _
    %v13 = vld [vmem:[%s1] sm:$0xf]
    %v14 = vld [vmem:[%s1 + $0x4] sm:$0xf]
    %v15 = vld [vmem:[%s1 + $0x8] sm:$0xf]
    %v16 = vld [vmem:[%s1 + $0xc] sm:$0xf]
    %v17 = vld [vmem:[%s1 + $0x10] sm:$0xf]
    %v18 = vld [vmem:[%s1 + $0x14] sm:$0xf]
    %v19 = vld [vmem:[%s1 + $0x18] sm:$0xf]
    %v20 = vld [vmem:[%s1 + $0x1c] sm:$0xf]
    %v21 = vld [vmem:[%s1 + $0x20] sm:$0xf]
    %v22 = vld [vmem:[%s1 + $0x24] sm:$0xf]
    %v23 = vld [vmem:[%s1 + $0x28] sm:$0xf]
    %v24 = vld [vmem:[%s1 + $0x2c] sm:$0xf]
    %v25 = vld [vmem:[%s1 + $0x30] sm:$0xf]
    %v26 = vld [vmem:[%s1 + $0x34] sm:$0xf]
    %v27 = vld [vmem:[%s1 + $0x38] sm:$0xf]
    %v28 = vld [vmem:[%s1 + $0x3c] sm:$0xf]
    %v29 = vld [vmem:[%s1 + $0x90] sm:$0x1]
    %v30 = vunpack.c.l.bf16 %v29
    %v31 = vld [vmem:[%s0] sm:$0xf]
    %v32 = vld [vmem:[%s0 + $0x4] sm:$0xf]
    %v33 = vld [vmem:[%s0 + $0x8] sm:$0xf]
    %v34 = vld [vmem:[%s0 + $0xc] sm:$0x3]
    %v35 = vlaneseq
    %v36 = vshrl.u32 %v35, 7
    %v37 = vsub.s32 0, %v36
    %v38 = vrot.slane %v30, %v37
    %v43 = vunpack.c.l.b16 %v31
    %v44 = vunpack.c.l.b16 %v32
    %v45 = vunpack.c.l.b16 %v33
    %v46 = vunpack.c.l.b16 %v34
    %v47 = vpack.c.b16 %v44, %v43
    %v48 = vpack.c.b16 %v46, %v45
    %v67 = vunpack.c.l.b16 %v13
    %v68 = vunpack.c.l.b16 %v14
    %v69 = vunpack.c.l.b16 %v15
    %v70 = vunpack.c.l.b16 %v16
    %v71 = vunpack.c.l.b16 %v17
    %v72 = vunpack.c.l.b16 %v18
    %v73 = vunpack.c.l.b16 %v19
    %v74 = vunpack.c.l.b16 %v20
    %v75 = vunpack.c.l.b16 %v21
    %v76 = vunpack.c.l.b16 %v22
    %v77 = vunpack.c.l.b16 %v23
    %v78 = vunpack.c.l.b16 %v24
    %v79 = vunpack.c.l.b16 %v25
    %v80 = vunpack.c.l.b16 %v26
    %v81 = vunpack.c.l.b16 %v27
    %v82 = vunpack.c.l.b16 %v28
    %v83 = vpack.c.b16 %v68, %v67
    %v84 = vpack.c.b16 %v70, %v69
    %v85 = vpack.c.b16 %v72, %v71
    %v86 = vpack.c.b16 %v74, %v73
    %v87 = vpack.c.b16 %v76, %v75
    %v88 = vpack.c.b16 %v78, %v77
    %v89 = vpack.c.b16 %v80, %v79
    %v90 = vpack.c.b16 %v82, %v81
    %99 = vmatprep.subr.bf16.mxu0 0
    %100 = vmatpush1.bf16.msra.mxu0 %v83
    %101 = vmatprep.subr.bf16.mxu0 0
    %102 = vmatpush1.bf16.msra.mxu0 %v84
    %103 = vmatprep.subr.bf16.mxu0 0
    %104 = vmatpush1.bf16.msra.mxu0 %v85
    %105 = vmatprep.subr.bf16.mxu0 0
    %106 = vmatpush1.bf16.msra.mxu0 %v86
    %107 = vmatprep.subr.bf16.mxu0 0
    %108 = vmatpush1.bf16.msra.mxu0 %v87
    %109 = vmatprep.subr.bf16.mxu0 0
    %110 = vmatpush1.bf16.msra.mxu0 %v88
    %111 = vmatprep.subr.bf16.mxu0 0
    %112 = vmatpush1.bf16.msra.mxu0 %v89
    %113 = vmatprep.subr.bf16.mxu0 0
    %114 = vmatpush1.bf16.msra.mxu0 %v90
    %115 = vmatprep.subr.bf16.mxu0 0
    %116 = vmatpush1.bf16.msra.mxu0 0
    %117 = vmatprep.subr.bf16.mxu0 0
    %118 = vmatpush1.bf16.msra.mxu0 0
    %119 = vmatprep.subr.bf16.mxu0 0
    %120 = vmatpush1.bf16.msra.mxu0 0
    %121 = vmatprep.subr.bf16.mxu0 0
    %122 = vmatpush1.bf16.msra.mxu0 0
    %123 = vmatprep.subr.bf16.mxu0 0
    %124 = vmatpush1.bf16.msra.mxu0 0
    %125 = vmatprep.subr.bf16.mxu0 0
    %126 = vmatpush1.bf16.msra.mxu0 0
    %127 = vmatprep.subr.bf16.mxu0 0
    %128 = vmatpush1.bf16.msra.mxu0 0
    %129 = vmatprep.subr.bf16.mxu0 0
    %130 = vmatpush1.bf16.msra.mxu0 0
    %131 = vmatprep.mubr.bf16.mxu0 0
    %132 = vmatmul.mubr.bf16.gmra.mrb[0].mxu0 %v47
    %v133 = vpop.f32.mrb[0].mxu0
    %v134 = vadd.f32 %v38, %v133
    %v135 = vpop.f32.mrb[0].mxu0
    %v136 = vpop.f32.mrb[0].mxu0
    %v137 = vadd.f32 %v38, %v136
    %v138 = vpop.f32.mrb[0].mxu0
    %139 = vmatprep.mubr.bf16.mxu0 0
    %140 = vmatmul.mubr.bf16.gmra.mrb[0].mxu0 %v48
    %v141 = vpop.f32.mrb[0].mxu0
    %v142 = vadd.f32 %v38, %v141
    %v143 = vpop.f32.mrb[0].mxu0
    %v144 = vpop.f32.mrb[0].mxu0
    %v145 = vadd.f32 %v38, %v144
    %v146 = vpop.f32.mrb[0].mxu0
    %147 = vdwg.mxu0
    %vm148 = vcmp.gt.f32.partialorder %v134, 0.0
    %vm149 = vcmp.gt.f32.partialorder %v137, 0.0
    %vm150 = vcmp.gt.f32.partialorder %v142, 0.0
    %vm151 = vcmp.gt.f32.partialorder %v145, 0.0
    %v152 = vmul.f32 %v134, 0.01
    %v153 = vmul.f32 %v137, 0.01
    %v154 = vmul.f32 %v142, 0.01
    %v155 = vmul.f32 %v145, 0.01
    %v156 = vsel %vm148, %v134, %v152
    %v157 = vsel %vm149, %v137, %v153
    %v158 = vsel %vm150, %v142, %v154
    %v159 = vsel %vm151, %v145, %v155
    %v160 = vpack.c.bf16 %v157, %v156
    %v161 = vpack.c.bf16 %v159, %v158
    %vm162 = vsmask.f32 7424
    %v164 = vshrl.u32 %v160, 16
    %v166 = vshll.u32 %v160, 16
    %v168 = vrot.slane %v166, 1
    %v169 = vor.u32 %v164, %v168
    %v171 = vshll.u32 %v161, 16
    %v173 = vrot.slane %v171, 1
    %v174 = vsel %vm162, %v169, %v173
    %v175 = vshrl.u32 %v161, 16
    %v177 = vor.u32 %v175, %v173
    %178 = vrot.lane.b32.xlu0 %v174, 32
    %v179 = vpop.permute.xlu0 %178
    %180 = vrot.lane.b32.xlu0 %v177, 32
    %v181 = vpop.permute.xlu0 %180
    %vm184 = vcmask 1046528
    %v185 = vrot.slane %v160, 1
    %v186 = vrot.slane %v161, 1
    %v187 = vsel %vm184, %v185, %v186
    %188 = vrot.lane.b32.xlu0 %v187, 64
    %v189 = vpop.permute.xlu0 %188
    %190 = vrot.lane.b32.xlu0 %v186, 64
    %v191 = vpop.permute.xlu0 %190
    %vm192 = vcmask 261120
    %v194 = vsel %vm192, %v160, %v179
    %v196 = vsel %vm192, %v161, %v181
    %vm197 = vcmask 523264
    %v199 = vsel %vm197, %v194, %v189
    %v201 = vsel %vm197, %v196, %v191
    %v202 = vld [vmem:[%s1 + $0x40] sm:$0xf]
    %v203 = vld [vmem:[%s1 + $0x44] sm:$0xf]
    %v204 = vld [vmem:[%s1 + $0x48] sm:$0xf]
    %v205 = vld [vmem:[%s1 + $0x4c] sm:$0xf]
    %v206 = vld [vmem:[%s1 + $0x50] sm:$0xf]
    %v207 = vld [vmem:[%s1 + $0x54] sm:$0xf]
    %v208 = vld [vmem:[%s1 + $0x58] sm:$0xf]
    %v209 = vld [vmem:[%s1 + $0x5c] sm:$0xf]
    %v210 = vld [vmem:[%s1 + $0x60] sm:$0xf]
    %v211 = vld [vmem:[%s1 + $0x64] sm:$0xf]
    %v212 = vld [vmem:[%s1 + $0x68] sm:$0xf]
    %v213 = vld [vmem:[%s1 + $0x6c] sm:$0xf]
    %v214 = vld [vmem:[%s1 + $0x98] sm:$0x1]
    %v215 = vunpack.c.l.bf16 %v214
    %v216 = vlaneseq
    %v217 = vshrl.u32 %v216, 7
    %v218 = vsub.s32 0, %v217
    %v219 = vrot.slane %v215, %v218
    %v232 = vunpack.c.l.b16 %v202
    %v233 = vunpack.c.l.b16 %v203
    %v234 = vunpack.c.l.b16 %v204
    %v235 = vunpack.c.l.b16 %v205
    %v236 = vunpack.c.l.b16 %v206
    %v237 = vunpack.c.l.b16 %v207
    %v238 = vunpack.c.l.b16 %v208
    %v239 = vunpack.c.l.b16 %v209
    %v240 = vunpack.c.l.b16 %v210
    %v241 = vunpack.c.l.b16 %v211
    %v242 = vunpack.c.l.b16 %v212
    %v243 = vunpack.c.l.b16 %v213
    %v244 = vpack.c.b16 %v233, %v232
    %v245 = vpack.c.b16 %v235, %v234
    %v246 = vpack.c.b16 %v237, %v236
    %v247 = vpack.c.b16 %v239, %v238
    %v248 = vpack.c.b16 %v241, %v240
    %v249 = vpack.c.b16 %v243, %v242
    %vm256 = vcmask 785408
    %v257 = vsel %vm256, %v199, 0
    %v259 = vsel %vm256, %v201, 0
    %261 = vmatprep.subr.bf16.mxu0 0
    %262 = vmatpush1.bf16.msra.mxu0 %v244
    %263 = vmatprep.subr.bf16.mxu0 0
    %264 = vmatpush1.bf16.msra.mxu0 %v245
    %265 = vmatprep.subr.bf16.mxu0 0
    %266 = vmatpush1.bf16.msra.mxu0 %v246
    %267 = vmatprep.subr.bf16.mxu0 0
    %268 = vmatpush1.bf16.msra.mxu0 %v247
    %269 = vmatprep.subr.bf16.mxu0 0
    %270 = vmatpush1.bf16.msra.mxu0 %v248
    %271 = vmatprep.subr.bf16.mxu0 0
    %272 = vmatpush1.bf16.msra.mxu0 %v249
    %273 = vmatprep.subr.bf16.mxu0 0
    %274 = vmatpush1.bf16.msra.mxu0 0
    %275 = vmatprep.subr.bf16.mxu0 0
    %276 = vmatpush1.bf16.msra.mxu0 0
    %277 = vmatprep.subr.bf16.mxu0 0
    %278 = vmatpush1.bf16.msra.mxu0 0
    %279 = vmatprep.subr.bf16.mxu0 0
    %280 = vmatpush1.bf16.msra.mxu0 0
    %281 = vmatprep.subr.bf16.mxu0 0
    %282 = vmatpush1.bf16.msra.mxu0 0
    %283 = vmatprep.subr.bf16.mxu0 0
    %284 = vmatpush1.bf16.msra.mxu0 0
    %285 = vmatprep.subr.bf16.mxu0 0
    %286 = vmatpush1.bf16.msra.mxu0 0
    %287 = vmatprep.subr.bf16.mxu0 0
    %288 = vmatpush1.bf16.msra.mxu0 0
    %289 = vmatprep.subr.bf16.mxu0 0
    %290 = vmatpush1.bf16.msra.mxu0 0
    %291 = vmatprep.subr.bf16.mxu0 0
    %292 = vmatpush1.bf16.msra.mxu0 0
    %293 = vmatprep.mubr.bf16.mxu0 0
    %294 = vmatmul.mubr.bf16.gmra.mrb[0].mxu0 %v257
    %v295 = vpop.f32.mrb[0].mxu0
    %v296 = vadd.f32 %v219, %v295
    %v297 = vpop.f32.mrb[0].mxu0
    %v298 = vpop.f32.mrb[0].mxu0
    %v299 = vadd.f32 %v219, %v298
    %v300 = vpop.f32.mrb[0].mxu0
    %301 = vmatprep.mubr.bf16.mxu0 0
    %302 = vmatmul.mubr.bf16.gmra.mrb[0].mxu0 %v259
    %v303 = vpop.f32.mrb[0].mxu0
    %v304 = vadd.f32 %v219, %v303
    %v305 = vpop.f32.mrb[0].mxu0
    %v306 = vpop.f32.mrb[0].mxu0
    %v307 = vadd.f32 %v219, %v306
    %v308 = vpop.f32.mrb[0].mxu0
    %309 = vdwg.mxu0
    %vm310 = vcmp.gt.f32.partialorder %v296, 0.0
    %vm311 = vcmp.gt.f32.partialorder %v299, 0.0
    %vm312 = vcmp.gt.f32.partialorder %v304, 0.0
    %vm313 = vcmp.gt.f32.partialorder %v307, 0.0
    %v314 = vmul.f32 %v296, 0.01
    %v315 = vmul.f32 %v299, 0.01
    %v316 = vmul.f32 %v304, 0.01
    %v317 = vmul.f32 %v307, 0.01
    %v318 = vsel %vm310, %v296, %v314
    %v319 = vsel %vm311, %v299, %v315
    %v320 = vsel %vm312, %v304, %v316
    %v321 = vsel %vm313, %v307, %v317
    %v322 = vlaneseq
    %v323 = vshrl.u32 %v322, 7
    %v324 = vadd.s32 %v323, 8
    %v325 = vadd.s32 %v323, 16
    %v326 = vadd.s32 %v323, 24
    %vm327 = vcmp.ge.s32.totalorder %v323, 0
    %vm328 = vcmp.ge.s32.totalorder %v324, 0
    %vm329 = vcmp.ge.s32.totalorder %v325, 0
    %vm330 = vcmp.ge.s32.totalorder %v326, 0
    %vm331 = vcmp.lt.s32.totalorder %v323, 12
    %vm332 = vcmp.lt.s32.totalorder %v324, 12
    %vm333 = vcmp.lt.s32.totalorder %v325, 12
    %vm334 = vcmp.lt.s32.totalorder %v326, 12
    %vm335 = vmand %vm327, %vm331
    %vm336 = vmand %vm328, %vm332
    %vm337 = vmand %vm329, %vm333
    %vm338 = vmand %vm330, %vm334
    %v339 = vand.u32 %v323, 1
    %v340 = vand.u32 %v324, 1
    %v341 = vand.u32 %v325, 1
    %v342 = vand.u32 %v326, 1
    %vm343 = vcmp.eq.s32.totalorder %v339, 0
    %vm344 = vcmp.eq.s32.totalorder %v340, 0
    %vm345 = vcmp.eq.s32.totalorder %v341, 0
    %vm346 = vcmp.eq.s32.totalorder %v342, 0
    %vm347 = vmand %vm335, %vm343
    %vm348 = vmand %vm336, %vm344
    %vm349 = vmand %vm337, %vm345
    %vm350 = vmand %vm338, %vm346
    %v351 = vsel %vm347, %v318, -inf
    %v352 = vsel %vm348, %v319, -inf
    %v353 = vsel %vm349, %v320, -inf
    %v354 = vsel %vm350, %v321, -inf
    %v355 = vsel %vm192, %v351, -inf
    %v356 = vsel %vm192, %v352, -inf
    %v357 = vsel %vm192, %v353, -inf
    %vm358 = vcmask 254976
    %v359 = vsel %vm358, %v354, -inf
    %v360 = vmax.f32 %v355, %v356
    %v361 = vmax.f32 %v357, %v359
    %v362 = vmax.f32 %v360, %v361
    %v363 = vrot.slane %v362, 4
    %v364 = vmax.f32 %v362, %v363
    %v365 = vrot.slane %v364, 2
    %v366 = vmax.f32 %v364, %v365
    %v367 = vrot.slane %v366, 1
    %v368 = vmax.f32 %v366, %v367
    %v369 = vsub.s32 %v323, 14
    %v370 = vsub.s32 %v324, 14
    %v371 = vsub.s32 %v325, 14
    %v372 = vsub.s32 %v326, 14
    %vm373 = vcmp.ge.s32.totalorder %v369, 0
    %vm374 = vcmp.ge.s32.totalorder %v370, 0
    %vm375 = vcmp.ge.s32.totalorder %v371, 0
    %vm376 = vcmp.ge.s32.totalorder %v372, 0
    %vm377 = vcmp.lt.s32.totalorder %v369, 12
    %vm378 = vcmp.lt.s32.totalorder %v370, 12
    %vm379 = vcmp.lt.s32.totalorder %v371, 12
    %vm380 = vcmp.lt.s32.totalorder %v372, 12
    %vm381 = vmand %vm373, %vm377
    %vm382 = vmand %vm374, %vm378
    %vm383 = vmand %vm375, %vm379
    %vm384 = vmand %vm376, %vm380
    %v385 = vand.u32 %v369, 1
    %v386 = vand.u32 %v370, 1
    %v387 = vand.u32 %v371, 1
    %v388 = vand.u32 %v372, 1
    %vm389 = vcmp.eq.s32.totalorder %v385, 0
    %vm390 = vcmp.eq.s32.totalorder %v386, 0
    %vm391 = vcmp.eq.s32.totalorder %v387, 0
    %vm392 = vcmp.eq.s32.totalorder %v388, 0
    %vm393 = vmand %vm381, %vm389
    %vm394 = vmand %vm382, %vm390
    %vm395 = vmand %vm383, %vm391
    %vm396 = vmand %vm384, %vm392
    %v397 = vsel %vm393, %v318, -inf
    %v398 = vsel %vm394, %v319, -inf
    %v399 = vsel %vm395, %v320, -inf
    %v400 = vsel %vm396, %v321, -inf
    %v401 = vsel %vm192, %v397, -inf
    %v402 = vsel %vm192, %v398, -inf
    %v403 = vsel %vm192, %v399, -inf
    %v404 = vsel %vm358, %v400, -inf
    %v405 = vmax.f32 %v401, %v402
    %v406 = vmax.f32 %v403, %v404
    %v407 = vmax.f32 %v405, %v406
    %v408 = vrot.slane %v407, 4
    %v409 = vmax.f32 %v407, %v408
    %v410 = vrot.slane %v409, 2
    %v411 = vmax.f32 %v409, %v410
    %v412 = vrot.slane %v411, 1
    %v413 = vmax.f32 %v411, %v412
    %vm414 = vcmask 1040384
    %v415 = vsel %vm414, %v368, %v413
    %v416 = vld [vmem:[%s1 + $0x70] sm:$0xf]
    %v417 = vld [vmem:[%s1 + $0x74] sm:$0xf]
    %v418 = vld [vmem:[%s1 + $0x78] sm:$0xf]
    %v419 = vld [vmem:[%s1 + $0x7c] sm:$0xf]
    %v420 = vld [vmem:[%s1 + $0xa0] sm:$0x1]
    %v421 = vunpack.c.l.bf16 %v420
    %v422 = vpack.c.bf16 %v415, %v415
    %v423 = vlaneseq
    %v424 = vshrl.u32 %v423, 7
    %v425 = vsub.s32 0, %v424
    %v426 = vrot.slane %v421, %v425
    %v431 = vunpack.c.l.b16 %v416
    %v432 = vunpack.c.l.b16 %v417
    %v433 = vunpack.c.l.b16 %v418
    %v434 = vunpack.c.l.b16 %v419
    %v435 = vpack.c.b16 %v432, %v431
    %v436 = vpack.c.b16 %v434, %v433
    %v440 = vsel %vm192, %v422, 0
    %442 = vmatprep.subr.bf16.mxu0 0
    %443 = vmatpush1.bf16.msra.mxu0 %v435
    %444 = vmatprep.subr.bf16.mxu0 0
    %445 = vmatpush1.bf16.msra.mxu0 %v436
    %446 = vmatprep.subr.bf16.mxu0 0
    %447 = vmatpush1.bf16.msra.mxu0 0
    %448 = vmatprep.subr.bf16.mxu0 0
    %449 = vmatpush1.bf16.msra.mxu0 0
    %450 = vmatprep.subr.bf16.mxu0 0
    %451 = vmatpush1.bf16.msra.mxu0 0
    %452 = vmatprep.subr.bf16.mxu0 0
    %453 = vmatpush1.bf16.msra.mxu0 0
    %454 = vmatprep.subr.bf16.mxu0 0
    %455 = vmatpush1.bf16.msra.mxu0 0
    %456 = vmatprep.subr.bf16.mxu0 0
    %457 = vmatpush1.bf16.msra.mxu0 0
    %458 = vmatprep.subr.bf16.mxu0 0
    %459 = vmatpush1.bf16.msra.mxu0 0
    %460 = vmatprep.subr.bf16.mxu0 0
    %461 = vmatpush1.bf16.msra.mxu0 0
    %462 = vmatprep.subr.bf16.mxu0 0
    %463 = vmatpush1.bf16.msra.mxu0 0
    %464 = vmatprep.subr.bf16.mxu0 0
    %465 = vmatpush1.bf16.msra.mxu0 0
    %466 = vmatprep.subr.bf16.mxu0 0
    %467 = vmatpush1.bf16.msra.mxu0 0
    %468 = vmatprep.subr.bf16.mxu0 0
    %469 = vmatpush1.bf16.msra.mxu0 0
    %470 = vmatprep.subr.bf16.mxu0 0
    %471 = vmatpush1.bf16.msra.mxu0 0
    %472 = vmatprep.subr.bf16.mxu0 0
    %473 = vmatpush1.bf16.msra.mxu0 0
    %474 = vmatprep.mubr.bf16.mxu0 0
    %475 = vmatmul.mubr.bf16.gmra.mrb[0].mxu0 %v440
    %v476 = vpop.f32.mrb[0].mxu0
    %v477 = vadd.f32 %v426, %v476
    %v478 = vpop.f32.mrb[0].mxu0
    %v479 = vpop.f32.mrb[0].mxu0
    %v480 = vpop.f32.mrb[0].mxu0
    %481 = vdwg.mxu0
    %v482 = vtanh.pop %v477
    %v483 = vld [vmem:[%s1 + $0x80] sm:$0xf]
    %v484 = vld [vmem:[%s1 + $0x84] sm:$0xf]
    %v485 = vld [vmem:[%s1 + $0x88] sm:$0xf]
    %v486 = vld [vmem:[%s1 + $0x8c] sm:$0xf]
    %v487 = vld [vmem:[%s1 + $0xa8] sm:$0x1]
    %v488 = vunpack.c.l.bf16 %v487
    %v489 = vpack.c.bf16 %v482, %v482
    %v490 = vlaneseq
    %v491 = vshrl.u32 %v490, 7
    %v492 = vsub.s32 0, %v491
    %v493 = vrot.slane %v488, %v492
    %v498 = vunpack.c.l.b16 %v483
    %v499 = vunpack.c.l.b16 %v484
    %v500 = vunpack.c.l.b16 %v485
    %v501 = vunpack.c.l.b16 %v486
    %v502 = vpack.c.b16 %v499, %v498
    %v503 = vpack.c.b16 %v501, %v500
    %v507 = vsel %vm192, %v489, 0
    %509 = vmatprep.subr.bf16.mxu0 0
    %510 = vmatpush1.bf16.msra.mxu0 %v502
    %511 = vmatprep.subr.bf16.mxu0 0
    %512 = vmatpush1.bf16.msra.mxu0 %v503
    %513 = vmatprep.subr.bf16.mxu0 0
    %514 = vmatpush1.bf16.msra.mxu0 0
    %515 = vmatprep.subr.bf16.mxu0 0
    %516 = vmatpush1.bf16.msra.mxu0 0
    %517 = vmatprep.subr.bf16.mxu0 0
    %518 = vmatpush1.bf16.msra.mxu0 0
    %519 = vmatprep.subr.bf16.mxu0 0
    %520 = vmatpush1.bf16.msra.mxu0 0
    %521 = vmatprep.subr.bf16.mxu0 0
    %522 = vmatpush1.bf16.msra.mxu0 0
    %523 = vmatprep.subr.bf16.mxu0 0
    %524 = vmatpush1.bf16.msra.mxu0 0
    %525 = vmatprep.subr.bf16.mxu0 0
    %526 = vmatpush1.bf16.msra.mxu0 0
    %527 = vmatprep.subr.bf16.mxu0 0
    %528 = vmatpush1.bf16.msra.mxu0 0
    %529 = vmatprep.subr.bf16.mxu0 0
    %530 = vmatpush1.bf16.msra.mxu0 0
    %531 = vmatprep.subr.bf16.mxu0 0
    %532 = vmatpush1.bf16.msra.mxu0 0
    %533 = vmatprep.subr.bf16.mxu0 0
    %534 = vmatpush1.bf16.msra.mxu0 0
    %535 = vmatprep.subr.bf16.mxu0 0
    %536 = vmatpush1.bf16.msra.mxu0 0
    %537 = vmatprep.subr.bf16.mxu0 0
    %538 = vmatpush1.bf16.msra.mxu0 0
    %539 = vmatprep.subr.bf16.mxu0 0
    %540 = vmatpush1.bf16.msra.mxu0 0
    %541 = vmatprep.mubr.bf16.mxu0 0
    %542 = vmatmul.mubr.bf16.gmra.mrb[0].mxu0 %v507
    %v543 = vpop.f32.mrb[0].mxu0
    %v544 = vadd.f32 %v493, %v543
    %v545 = vpop.f32.mrb[0].mxu0
    %v546 = vpop.f32.mrb[0].mxu0
    %v547 = vpop.f32.mrb[0].mxu0
    %548 = vdwg.mxu0
    %vm549 = vcmask 1041408
    %v550 = vsel %vm549, %v544, -inf
    %551 = vmax.xlane.f32.xlu0 %v550
    %v552 = vpop.xlane.xlu0 %551
    %v553 = vsub.f32 %v544, %v552
    %v554 = vmul.f32 %v553, 1.442695
    %v555 = vpow.pop %v554
    %v556 = vsel %vm549, %v555, 0.0
    %557 = vadd.xlane.f32.xlu0 %v556
    %v558 = vpop.xlane.xlu0 %557
    %v559 = vrcp.pop %v558
    %v560 = vmul.f32 %v555, %v559
    %561 = vst [vmem:[#allocation2] sm:$0x3] %v560
    // Predicated region
    $region10: #{bimodal_cnn_forward.1} parent=1 // pred_check
      _
    $region11: #{bimodal_cnn_forward.1} parent=1 // pred_check_branch
      %563 = sbr.rel (0) target = $region13
    $region12: #{bimodal_cnn_forward.1} parent=1 // pred_region
      %s565 = ssub.s32 32, 32
      %566 = vsyncadd [#allocation3], %s565
      %s568 = sshll.u32 [#allocation2], 4
      %s569 = int_to_ptr.vmem [resolvable:$true] %s568
      %571 = dma.vmem_to_hbm [thread:$0]  %s569, 32, %s2, [#allocation3]
    $region13: #{bimodal_cnn_forward.1} parent=1 // pred_fallthru
      _
    // Predicated region
    $region14: #{bimodal_cnn_forward.1} parent=1 // pred_check
      _
    $region15: #{bimodal_cnn_forward.1} parent=1 // pred_check_branch
      %573 = sbr.rel (0) target = $region17
    $region16: #{bimodal_cnn_forward.1} parent=1 // pred_region
      %574 = dma.done [#allocation3], 32
    $region17: #{bimodal_cnn_forward.1} parent=1 // pred_fallthru
      _
    %575 = vsyncpa [#allocation3], 1

</llo_original>
